<compile_context>
chip_gen: v7x
topology: tpu7x:2x2x1
jax: 0.10.0
libtpu: 0.0.40
codegen_flags: <defaults>
</compile_context>

<pallas_src>
import functools

import jax
import jax.numpy as jnp
from jax import lax
from jax.experimental import pallas as pl
from jax.experimental.pallas import tpu as pltpu

_LANE = 128
_SUBLANE = 8


def _round_up(v, m):
    return (v + m - 1) // m * m


def _tpu_budgets():
    """(x-tile byte target, scoped-VMEM limit) per TPU generation."""
    vmem_cap = 128 * 1024 * 1024
    try:
        vmem_cap = int(pltpu.get_tpu_info().vmem_capacity_bytes)
    except Exception:
        pass
    if vmem_cap <= 64 * 1024 * 1024:            # v7x: 64 MiB VMEM per TC
        return 4 * 1024 * 1024, 44 * 1024 * 1024
    return 8 * 1024 * 1024, 64 * 1024 * 1024    # v5e / v6e: 128 MiB VMEM


def _num_tensorcores():
    try:
        d = jax.devices()[0]
        nc = getattr(d, "num_cores", None)
        if isinstance(nc, int) and nc > 0:
            return nc
        if "v7" in d.device_kind.lower():
            return 2
    except Exception:
        pass
    return 1


def _native_mul_ok(dtype):
    """bf16 multiply runs natively on v6e/v7x VPUs; keep f32 math on v5e."""
    if jnp.dtype(dtype).itemsize >= 4:
        return True
    try:
        kind = jax.devices()[0].device_kind.lower()
    except Exception:
        kind = ""
    return "v5" not in kind


def _choose_tiles(n, c, hw, itemsize, tile_target, num_cores):
    """Pick (c_tile, hw_tile): lane-dense, <= ~tile_target bytes of x per block."""
    hw_ceil = _round_up(hw, _LANE)
    cols = tile_target // max(c * itemsize, 1)
    if cols >= _LANE:
        # Full-C blocks (the common case).
        c_tile = c
        hw_tile = int(min(hw_ceil, (cols // _LANE) * _LANE))
    else:
        # Very large C: tile the channel axis instead of shrinking the lanes.
        hw_tile = int(min(hw_ceil, 4 * _LANE))
        c_tile = (tile_target // (hw_tile * itemsize)) // _SUBLANE * _SUBLANE
        c_tile = int(min(max(c_tile, _SUBLANE), c))
        if c_tile >= c:
            c_tile = c
    # Keep >= 2 grid steps per TensorCore (v7x has 2 TCs/chip) as long as the
    # tiles stay large enough to amortize the ~0.35 us per-step overhead.
    min_steps = 2 * num_cores
    while n * pl.cdiv(hw, hw_tile) < min_steps and hw_tile >= 8 * _LANE:
        hw_tile = (hw_tile // 2) // _LANE * _LANE
    return c_tile, hw_tile


# ---------------------------------------------------------------------------
# Kernel 1: per-column channel mean  (n, c, hw) -> (n, 1, hw)  [f32 stats]
#           grid = (n, hw_tiles, c_tiles); C is the (arbitrary) reduction axis.
# ---------------------------------------------------------------------------
def _colmean_kernel(x_ref, o_ref, *, inv_c, c_total, c_tile):
    ck = pl.program_id(2)

    @pl.when(ck == 0)
    def _init():
        o_ref[...] = jnp.zeros_like(o_ref)

    x = x_ref[...]                                          # (1, c_tile, T)
    if c_total % c_tile != 0:
        # Mask channels past `c` in the partial C block (garbage sublanes
        # would otherwise be summed into the reduction).
        valid = jnp.minimum(c_tile, c_total - ck * c_tile)
        ch = lax.broadcasted_iota(jnp.int32, x.shape, 1)
        x = jnp.where(ch < valid, x, jnp.zeros_like(x))
    # Accumulate in f32 without materializing a full f32 copy of the tile.
    o_ref[...] += jnp.sum(x, axis=1, keepdims=True, dtype=jnp.float32)

    @pl.when(ck == pl.num_programs(2) - 1)
    def _finalize():
        o_ref[...] = o_ref[...] * inv_c


def column_mean(x3, c_tile, hw_tile, vmem_limit):
    n, c, hw = x3.shape
    grid = (n, pl.cdiv(hw, hw_tile), pl.cdiv(c, c_tile))
    return pl.pallas_call(
        functools.partial(_colmean_kernel, inv_c=float(1.0 / c),
                          c_total=c, c_tile=c_tile),
        out_shape=jax.ShapeDtypeStruct((n, 1, hw), jnp.float32),
        grid_spec=pltpu.PrefetchScalarGridSpec(
            num_scalar_prefetch=0,
            grid=grid,
            in_specs=[pl.BlockSpec((1, c_tile, hw_tile),
                                   lambda i, j, k: (i, k, j))],
            out_specs=pl.BlockSpec((1, 1, hw_tile),
                                   lambda i, j, k: (i, 0, j)),
        ),
        compiler_params=pltpu.CompilerParams(
            dimension_semantics=("parallel", "parallel", "arbitrary"),
            vmem_limit_bytes=vmem_limit),
    )(x3)


# ---------------------------------------------------------------------------
# Kernel 2: thresholded blend   out = x * ((stats >= thr)*tau + (1-tau))
#           thr is a per-batch scalar delivered via scalar prefetch (SMEM).
#           grid = (n, hw_tiles, c_tiles); C innermost so the stats tile is
#           reused across C blocks without re-DMA.
# ---------------------------------------------------------------------------
def _blend_kernel(thr_ref, x_ref, s_ref, o_ref, *, tau, native_mul):
    b = pl.program_id(0)
    thr = thr_ref[b]                                        # scalar f32 (SMEM)
    keep = (s_ref[...] >= thr).astype(jnp.float32)          # (1, 1, T)
    coeff = keep * tau + (1.0 - tau)                        # (1, 1, T) f32
    if native_mul:
        # v6e/v7x: multiply in the input dtype (no full-tile f32 upcast).
        o_ref[...] = x_ref[...] * coeff.astype(o_ref.dtype)
    else:
        # v5e bf16 path: no native bf16 VALU, do the math in f32.
        o_ref[...] = (x_ref[...].astype(jnp.float32) * coeff).astype(o_ref.dtype)


def masked_blend(x3, colstats, thr, tau, c_tile, hw_tile, vmem_limit, native_mul):
    n, c, hw = x3.shape
    grid = (n, pl.cdiv(hw, hw_tile), pl.cdiv(c, c_tile))
    return pl.pallas_call(
        functools.partial(_blend_kernel, tau=float(tau), native_mul=native_mul),
        out_shape=jax.ShapeDtypeStruct((n, c, hw), x3.dtype),
        grid_spec=pltpu.PrefetchScalarGridSpec(
            num_scalar_prefetch=1,
            grid=grid,
            in_specs=[
                pl.BlockSpec((1, c_tile, hw_tile), lambda i, j, k, t: (i, k, j)),
                pl.BlockSpec((1, 1, hw_tile), lambda i, j, k, t: (i, 0, j)),
            ],
            out_specs=pl.BlockSpec((1, c_tile, hw_tile),
                                   lambda i, j, k, t: (i, k, j)),
        ),
        compiler_params=pltpu.CompilerParams(
            dimension_semantics=("parallel", "parallel", "parallel"),
            vmem_limit_bytes=vmem_limit),
        # TODO(synk): when the caller donates x, alias it to the output via
        # input_output_aliases to save one n*c*hw HBM allocation (peak memory).
    )(thr, x3, colstats)


# ---------------------------------------------------------------------------
# Module-equivalent wrapper
# ---------------------------------------------------------------------------
def sparsify_hypercol_forward(x, tau, topk=0.25,
                              tile_target_bytes=None, vmem_limit_bytes=None):
    """x: [n, c, h, w] (float dtype, NCHW).  Returns [n, c, h, w] in x.dtype."""
    n, c, h, w = x.shape
    hw = h * w

    default_target, default_limit = _tpu_budgets()
    tile_target = tile_target_bytes or default_target
    vmem_limit = vmem_limit_bytes or default_limit

    native_mul = _native_mul_ok(x.dtype)
    itemsize = jnp.dtype(x.dtype).itemsize
    sizing_itemsize = itemsize if native_mul else max(itemsize, 4)

    c_tile, hw_tile = _choose_tiles(n, c, hw, sizing_itemsize, tile_target,
                                    _num_tensorcores())

    # No pad / slice copies of x: arrays stay at natural hw extent, partial
    # last blocks are masked by Pallas on store.
    x3 = x.reshape(n, c, hw)

    # Pass 1 (Pallas): channel-mean selection statistics.
    colstats = column_mean(x3, c_tile, hw_tile, vmem_limit)    # (n, 1, hw) f32

    # Glue: per-batch k-th largest column mean -> scalar threshold.
    keep_top_num = max(int(topk * hw), 1)
    # TODO(synk): for very large h*w this exact per-batch top_k (O(hw log hw),
    # serialized between the two streaming passes) can be swapped for
    # jax.lax.approx_max_k or a histogram/quantile threshold pass.
    kth = jax.lax.top_k(colstats[:, 0, :], keep_top_num)[0][:, -1]
    thr = kth.astype(jnp.float32)                              # (n,)

    # Pass 2 (Pallas): thresholded blend over all n*c*hw elements.
    out3 = masked_blend(x3, colstats, thr, tau, c_tile, hw_tile,
                        vmem_limit, native_mul)                # (n, c, hw)
    return out3.reshape(n, c, h, w)


# ---------------------------------------------------------------------------
def _reference(x, tau, topk):
    n, c, h, w = x.shape
    x3 = x.reshape(n, c, h * w).astype(jnp.float32)
    stats = jnp.mean(x3, axis=1)
    k = max(int(topk * h * w), 1)
    _, idx = jax.lax.top_k(stats, k)
    mask = jnp.zeros((n, h * w), jnp.float32).at[
        jnp.arange(n)[:, None], idx].set(1.0)
    out = mask[:, None, :] * x3 * tau + x3 * (1.0 - tau)
    return out.reshape(n, c, h, w).astype(x.dtype)


if __name__ == "__main__":
    tau, topk = 0.5, 0.25

    # Case 1: base shapes implied by the module.
    x1 = jax.random.normal(jax.random.PRNGKey(0), (2, 4, 16, 16),
                           dtype=jnp.float32)
    o1 = jax.block_until_ready(sparsify_hypercol_forward(x1, tau, topk))
    assert o1.dtype == x1.dtype, "dtype mismatch"
    assert jnp.allclose(o1, _reference(x1, tau, topk), atol=1e-5), "case1 mismatch"

    # Case 2: h*w not a multiple of 128 (exercises the no-pad partial-block path).
    x2 = jax.random.normal(jax.random.PRNGKey(1), (2, 4, 10, 10),
                           dtype=jnp.float32)
    o2 = jax.block_until_ready(sparsify_hypercol_forward(x2, tau, topk))
    assert jnp.allclose(o2, _reference(x2, tau, topk), atol=1e-5), "case2 mismatch"

    # Case 3: tiny tile budget forces channel tiling incl. a partial C block.
    x3 = jax.random.normal(jax.random.PRNGKey(2), (1, 12, 16, 16),
                           dtype=jnp.float32)
    o3 = jax.block_until_ready(
        sparsify_hypercol_forward(x3, tau, topk, tile_target_bytes=4096))
    assert jnp.allclose(o3, _reference(x3, tau, topk), atol=1e-5), "case3 mismatch"

    print("KERNEL_OK")
</pallas_src>

<mosaic_0001>
module attributes {stable_mosaic.version = 11 : i64} {
  func.func @_colmean_kernel(%arg0: i32, %arg1: i32, %arg2: i32, %arg3: memref<1x4x256xf32, #tpu.memory_space<vmem>>, %arg4: memref<1x1x256xf32, #tpu.memory_space<vmem>>) attributes {dimension_semantics = [#tpu.dimension_semantics<parallel>, #tpu.dimension_semantics<parallel>, #tpu.dimension_semantics<arbitrary>], iteration_bounds = array<i64: 2, 1, 1>, scalar_prefetch = 0 : i64, scratch_operands = 0 : i64, tpu.core_type = #tpu.core_type<tc>, window_params = [{transform_indices = @transform_0, window_bounds = array<i64: 1, 4, 256>}, {transform_indices = @transform_1, window_bounds = array<i64: 1, 1, 256>}]} {
    %c0_i32 = arith.constant 0 : i32
    %0 = arith.cmpi eq, %arg2, %c0_i32 : i32
    %1 = arith.extui %0 : i1 to i32
    %c0_i32_0 = arith.constant 0 : i32
    %2 = arith.cmpi ne, %1, %c0_i32_0 : i32
    scf.if %2 {
      %cst_11 = arith.constant 0.000000e+00 : f32
      %12 = vector.broadcast %cst_11 : f32 to vector<1x1x256xf32>
      %c0_12 = arith.constant 0 : index
      %c0_13 = arith.constant 0 : index
      %c0_14 = arith.constant 0 : index
      %13 = vector.load %arg4[%c0_12, %c0_13, %c0_14] : memref<1x1x256xf32, #tpu.memory_space<vmem>>, vector<1x1x256xf32>
      tpu.vector_store %arg4[%c0_12, %c0_13, %c0_14], %12 {strides = array<i32>} : memref<1x1x256xf32, #tpu.memory_space<vmem>>, vector<1x1x256xf32>,
    } else {
    }
    %c0 = arith.constant 0 : index
    %c0_1 = arith.constant 0 : index
    %c0_2 = arith.constant 0 : index
    %3 = vector.load %arg3[%c0, %c0_1, %c0_2] : memref<1x4x256xf32, #tpu.memory_space<vmem>>, vector<1x4x256xf32>
    %c0_3 = arith.constant 0 : index
    %c0_4 = arith.constant 0 : index
    %c0_5 = arith.constant 0 : index
    %4 = vector.load %arg4[%c0_3, %c0_4, %c0_5] : memref<1x1x256xf32, #tpu.memory_space<vmem>>, vector<1x1x256xf32>
    %cst = arith.constant dense<0.000000e+00> : vector<1x256xf32>
    %5 = vector.multi_reduction <add>, %3, %cst [1] : vector<1x4x256xf32> to vector<1x256xf32>
    %6 = vector.shape_cast %5 : vector<1x256xf32> to vector<1x1x256xf32>
    %7 = arith.addf %4, %6 : vector<1x1x256xf32>
    %c0_6 = arith.constant 0 : index
    %c0_7 = arith.constant 0 : index
    %c0_8 = arith.constant 0 : index
    %8 = vector.load %arg4[%c0_6, %c0_7, %c0_8] : memref<1x1x256xf32, #tpu.memory_space<vmem>>, vector<1x1x256xf32>
    tpu.vector_store %arg4[%c0_6, %c0_7, %c0_8], %7 {strides = array<i32>} : memref<1x1x256xf32, #tpu.memory_space<vmem>>, vector<1x1x256xf32>,
    %c0_i32_9 = arith.constant 0 : i32
    %9 = arith.cmpi eq, %arg2, %c0_i32_9 : i32
    %10 = arith.extui %9 : i1 to i32
    %c0_i32_10 = arith.constant 0 : i32
    %11 = arith.cmpi ne, %10, %c0_i32_10 : i32
    scf.if %11 {
      %c0_11 = arith.constant 0 : index
      %c0_12 = arith.constant 0 : index
      %c0_13 = arith.constant 0 : index
      %12 = vector.load %arg4[%c0_11, %c0_12, %c0_13] : memref<1x1x256xf32, #tpu.memory_space<vmem>>, vector<1x1x256xf32>
      %cst_14 = arith.constant 2.500000e-01 : f32
      %13 = vector.broadcast %cst_14 : f32 to vector<1x1x256xf32>
      %14 = arith.mulf %12, %13 : vector<1x1x256xf32>
      %c0_15 = arith.constant 0 : index
      %c0_16 = arith.constant 0 : index
      %c0_17 = arith.constant 0 : index
      %15 = vector.load %arg4[%c0_15, %c0_16, %c0_17] : memref<1x1x256xf32, #tpu.memory_space<vmem>>, vector<1x1x256xf32>
      tpu.vector_store %arg4[%c0_15, %c0_16, %c0_17], %14 {strides = array<i32>} : memref<1x1x256xf32, #tpu.memory_space<vmem>>, vector<1x1x256xf32>,
    } else {
    }
    return
  }
  func.func @transform_0(%arg0: i32, %arg1: i32, %arg2: i32) -> (i32, i32, i32) {
    %c0_i32 = arith.constant 0 : i32
    return %arg0, %arg2, %arg1 : i32, i32, i32
  }
  func.func @transform_1(%arg0: i32, %arg1: i32, %arg2: i32) -> (i32, i32, i32) {
    %c0_i32 = arith.constant 0 : i32
    %c0_i32_0 = arith.constant 0 : i32
    return %arg0, %c0_i32, %arg1 : i32, i32, i32
  }
}

</mosaic_0001>

<llo_original>
// kernel: tpu_custom_call.1
$region0: #{tpu_custom_call.1}
  #allocation0 [shape = 'u32[]', space=smem, size = 0x4, offset = 0x4, fixed_abs, tag = 'smem constant byte address 0x4 - core index']
  #allocation1 [shape = 'u32[144,128]{1,0:T(1,128)}', space=vmem, size = 0x12000, scoped, tag = 'internal scratch']
  %s0 = inlined_call_operand.hbm [shape: f32[2,4,256], index: 0, kind: input, shape index: {}]
  %s1 = inlined_call_operand.hbm [shape: f32[2,1,256], index: 1, kind: output, shape index: {}]
  %s2 = sld [smem:[#allocation0]]
  $region49: #{tpu_custom_call.1} parent=0
    _
  %s4 = ssub.s32 1, %s2
  %s5 = scalar_select 0, %s4, %s2
  $region1: #{tpu_custom_call.1} parent=0
    #allocation2 [shape = 'u8[8192]{0}', space=vmem, size = 0x2000, scoped, tag = 'input window, operand 0']
    #allocation3 [shape = 's32[2]{0}', space=sflag, size = 0x8, scoped, tag = 'scoped memory for tpu_custom_call.1']
    #allocation4 [shape = 's32[2]{0}', space=sflag, size = 0x8, scoped, tag = 'scoped memory for tpu_custom_call.1']
    #allocation5 [shape = 'u8[2048]{0}', space=vmem, size = 0x800, scoped, tag = 'output window, operand 0']
    %6 = vsyncpa [#allocation3], 0
    %s7 = scalar_lea.sflag [#allocation3], 1
    %8 = vsyncpa %s7, 0
    %9 = vsyncpa [#allocation4], 0
    %s10 = scalar_lea.sflag [#allocation4], 1
    %11 = vsyncpa %s10, 0
    loop: start=0, step=1, limit=4
    $region2: #{tpu_custom_call.1} parent=1 // loop_pre_header
      _
    $region3: #{tpu_custom_call.1} parent=1 // loop_header
      %s13 = sphi 0, %s17
      %p14 = scmp.ge.s32.totalorder %s13, 4
      %s20 = sphi 0, %s39
      %s21 = sphi 0, %s35
      %s22 = sphi 0, %s31
      %s23 = sphi 0, %s20
      %s24 = sphi 0, %s21
      %s25 = sphi 0, %s22
      %s26 = sphi 0, %s23
      %s27 = sphi 0, %s24
      %s28 = sphi 0, %s25
      %s46 = sphi 0, %s48
      %s49 = sphi 0, %s46
      %s50 = sphi 0, %s49
      %s66 = sphi 0, %s50
      %s74 = sphi 0, %s76
      %s77 = sphi 0, %s74
      %s78 = sphi 0, %s77
      %s94 = sphi 0, %s78
    $region4: #{tpu_custom_call.1} parent=1 // loop_header_branch
      %16 = sbr.rel (%p14) target = $region8
    $region5: #{tpu_custom_call.1} parent=1 // loop_body
      %s18 = ssub.s32 %s13, 1
      %s19 = ssub.s32 %s13, 2
      %s29 = sadd.s32 1, %s22
      %p30 = scmp.ge.s32.totalorder %s29, 1
      %s31 = scalar_select %p30, 0, %s29
      %s32 = sadd.s32 1, %s21
      %s33 = scalar_select %p30, %s32, %s21
      %p34 = scmp.ge.s32.totalorder %s33, 1
      %s35 = scalar_select %p34, 0, %s33
      %s36 = sadd.s32 1, %s20
      %s37 = scalar_select %p34, %s36, %s20
      %p38 = scmp.ge.s32.totalorder %s37, 2
      %s39 = scalar_select %p38, 0, %s37
      %s40 = ssub.s32 %s20, %s39
      %s41 = ssub.s32 %s22, %s31
      %s42 = sor.u32 %s40, %s41
      %s43 = ssub.s32 %s21, %s35
      %s44 = sor.u32 %s42, %s43
      %p45 = scmp.eq.s32.totalorder %s44, 0
      %s47 = sadd.s32 %s46, 1
      %s48 = scalar_select %p45, %s46, %s47
      %p51 = pneg %p45
      %p52 = scmp.eq.s32.totalorder %s13, 1
      %p53 = por %p51, %p52
      %p54 = scmp.ne.s32.totalorder %s46, %s49
      %p55 = scmp.eq.s32.totalorder %s13, 0
      %p56 = por %p54, %p55
      %p57 = scmp.ne.s32.totalorder %s46, %s49
      %p58 = scmp.eq.s32.totalorder %s18, 1
      %p59 = por %p57, %p58
      %p60 = scmp.ne.s32.totalorder %s49, %s50
      %p61 = scmp.eq.s32.totalorder %s18, 0
      %p62 = por %p60, %p61
      %p63 = scmp.ne.s32.totalorder %s49, %s50
      %p64 = scmp.eq.s32.totalorder %s19, 1
      %p65 = por %p63, %p64
      %p67 = scmp.ne.s32.totalorder %s50, %s66
      %p68 = scmp.eq.s32.totalorder %s19, 0
      %p69 = por %p67, %p68
      %s70 = ssub.s32 %s20, %s39
      %s71 = ssub.s32 %s21, %s35
      %s72 = sor.u32 %s70, %s71
      %p73 = scmp.eq.s32.totalorder %s72, 0
      %s75 = sadd.s32 %s74, 1
      %s76 = scalar_select %p73, %s74, %s75
      %p79 = pneg %p73
      %p80 = scmp.eq.s32.totalorder %s13, 1
      %p81 = por %p79, %p80
      %p82 = scmp.ne.s32.totalorder %s74, %s77
      %p83 = scmp.eq.s32.totalorder %s13, 0
      %p84 = por %p82, %p83
      %p85 = scmp.ne.s32.totalorder %s74, %s77
      %p86 = scmp.eq.s32.totalorder %s18, 1
      %p87 = por %p85, %p86
      %p88 = scmp.ne.s32.totalorder %s77, %s78
      %p89 = scmp.eq.s32.totalorder %s18, 0
      %p90 = por %p88, %p89
      %p91 = scmp.ne.s32.totalorder %s77, %s78
      %p92 = scmp.eq.s32.totalorder %s19, 1
      %p93 = por %p91, %p92
      %p95 = scmp.ne.s32.totalorder %s78, %s94
      %p96 = scmp.eq.s32.totalorder %s19, 0
      %p97 = por %p95, %p96
      %p98 = scmp.le.s32.totalorder 1, %s13
      %p99 = scmp.lt.s32.totalorder %s13, 3
      %p100 = pnand %p98, %p99
      %p101 = pneg %p100
      // Predicated region
      $region9: #{tpu_custom_call.1} parent=5 // pred_check
        _
      $region10: #{tpu_custom_call.1} parent=5 // pred_check_branch
        %103 = sbr.rel (%p100) target = $region12
      $region11: #{tpu_custom_call.1} parent=5 // pred_region
        %s104 = ssub.s32 %s13, 1
      $region12: #{tpu_custom_call.1} parent=5 // pred_fallthru
        _
      %p105 = scmp.lt.s32.totalorder %s13, 2
      // Predicated region
      $region13: #{tpu_custom_call.1} parent=5 // pred_check
        %p106 = pneg %p105
      $region14: #{tpu_custom_call.1} parent=5 // pred_check_branch
        %108 = sbr.rel (%p106) target = $region16
      $region15: #{tpu_custom_call.1} parent=5 // pred_region
        // Predicated region
        $region17: #{tpu_custom_call.1} parent=15 // pred_check
          %p109 = pneg %p56
        $region18: #{tpu_custom_call.1} parent=15 // pred_check_branch
          %111 = sbr.rel (%p109) target = $region20
        $region19: #{tpu_custom_call.1} parent=15 // pred_region
          %s112 = sand.u32 %s46, 1
          %s113 = scalar_lea.sflag [#allocation3], %s112
          %s114 = sand.u32 %s46, 1
          %s115 = smul.addr %s114, 8
          %s116 = scalar_lea.vmem [#allocation2], %s115
          %s117 = smul.u32 2, %s21
          %s119 = ssub.s32 128, 128
          %120 = vsyncadd %s113, %s119
          %s121 = smul.addr %s22, 2
          %s122 = sadd.s32 %s117, %s121
          %s123 = smul.addr %s20, 2
          %s124 = sadd.s32 %s122, %s123
          %s125 = smul.addr %s124, 64
          %s126 = scalar_lea.hbm %s0, %s125
          %s128 = sshll.u32 %s116, 4
          %s129 = int_to_ptr.vmem [resolvable:$true] %s128
          %131 = dma.hbm_to_vmem [thread:$0]  %s126, 128, %s129, %s113
        $region20: #{tpu_custom_call.1} parent=15 // pred_fallthru
          _
      $region16: #{tpu_custom_call.1} parent=5 // pred_fallthru
        _
      %p132 = scmp.le.s32.totalorder 1, %s13
      %p133 = scmp.lt.s32.totalorder %s13, 3
      %p134 = pnand %p132, %p133
      %p135 = pneg %p134
      // Predicated region
      $region21: #{tpu_custom_call.1} parent=5 // pred_check
        _
      $region22: #{tpu_custom_call.1} parent=5 // pred_check_branch
        %137 = sbr.rel (%p134) target = $region24
      $region23: #{tpu_custom_call.1} parent=5 // pred_region
        %s138 = ssub.s32 %s13, 1
        %s139 = sand.u32 %s49, 1
        %s140 = scalar_lea.sflag [#allocation3], %s139
        %s141 = sand.u32 %s49, 1
        %s142 = smul.addr %s141, 8
        %s143 = scalar_lea.vmem [#allocation2], %s142
        // Predicated region
        $region25: #{tpu_custom_call.1} parent=23 // pred_check
          %p144 = pneg %p62
        $region26: #{tpu_custom_call.1} parent=23 // pred_check_branch
          %146 = sbr.rel (%p144) target = $region28
        $region27: #{tpu_custom_call.1} parent=23 // pred_region
          %147 = dma.done %s140, 128
        $region28: #{tpu_custom_call.1} parent=23 // pred_fallthru
          _
        %s148 = sand.u32 %s49, 1
        %s149 = scalar_lea.sflag [#allocation3], %s148
        %s150 = sand.u32 %s49, 1
        %s151 = smul.addr %s150, 8
        %s152 = scalar_lea.vmem [#allocation2], %s151
        %p153 = pneg %p62
        %p154 = pneg %p59
        %p155 = pneg %p90
        %p156 = pneg %p87
        %s157 = sand.u32 %s77, 1
        %s158 = scalar_lea.sflag [#allocation4], %s157
        %s159 = sand.u32 %s77, 1
        %s160 = smul.addr %s159, 2
        %s161 = scalar_lea.vmem [#allocation5], %s160
        %s162 = smul.u32 2, %s24
        %s163 = smul.u32 2, %s24
        %p164 = scmp.eq.s32.totalorder %s25, 0
        // Predicated region
        $region29: #{tpu_custom_call.1} parent=23 // pred_check
          %p165 = pneg %p164
        $region30: #{tpu_custom_call.1} parent=23 // pred_check_branch
          %167 = sbr.rel (%p165) target = $region32
        $region31: #{tpu_custom_call.1} parent=23 // pred_region
          %v168 = vlaneseq
          %vm169 = vcmp.ge.s32.totalorder %v168, 0
          %vm170 = vcmp.lt.s32.totalorder %v168, 256
          %vm171 = vmand %vm169, %vm170
          %172 = vst.msk [vmem:[%s161] sm:$0x3] %vm171, 0.0
        $region32: #{tpu_custom_call.1} parent=23 // pred_fallthru
          _
        %v173 = vld [vmem:[%s143] sm:$0xff]
        %v174 = vld [vmem:[%s161] sm:$0x3]
        %v176 = vcombine.high %v173, %v173
        %vm178 = vcmask 1043456
        %v179 = vsel %vm178, %v173, 0.0
        %v180 = vrot.slane %v179, 4
        %v181 = vadd.f32 %v179, %v180
        %v182 = vrot.slane %v181, 2
        %v183 = vadd.f32 %v181, %v182
        %v184 = vrot.slane %v183, 1
        %v185 = vadd.f32 %v183, %v184
        %v186 = vsel %vm178, %v176, 0.0
        %v187 = vrot.slane %v186, 4
        %v188 = vadd.f32 %v186, %v187
        %v189 = vrot.slane %v188, 2
        %v190 = vadd.f32 %v188, %v189
        %v191 = vrot.slane %v190, 1
        %v192 = vadd.f32 %v190, %v191
        %v195 = vcombine.low %v185, %v192
        %v197 = vunpack.c.l.s4 1966171168
        %v198 = vunpack.c.0.s8 %v197
        %v199 = vlaneseq
        %v200 = vshrl.u32 %v199, 7
        %v201 = vsub.s32 %v198, %v200
        %v202 = vrot.slane %v195, %v201
        %v204 = vunpack.c.l.s4 1966171168
        %v205 = vunpack.c.0.s8 %v204
        %v206 = vlaneseq
        %v207 = vshrl.u32 %v206, 7
        %v208 = vsub.s32 %v205, %v207
        %v209 = vrot.slane %v202, %v208
        %v211 = vadd.f32 %v174, %v209
        %v212 = vlaneseq
        %vm213 = vcmp.ge.s32.totalorder %v212, 0
        %vm214 = vcmp.lt.s32.totalorder %v212, 256
        %vm215 = vmand %vm213, %vm214
        %216 = vst.msk [vmem:[%s161] sm:$0x3] %vm215, %v211
        // Predicated region
        $region33: #{tpu_custom_call.1} parent=23 // pred_check
          %p217 = pneg %p164
        $region34: #{tpu_custom_call.1} parent=23 // pred_check_branch
          %219 = sbr.rel (%p217) target = $region36
        $region35: #{tpu_custom_call.1} parent=23 // pred_region
          %v220 = vld [vmem:[%s161] sm:$0x3]
          %v221 = vmul.f32 %v220, 0.25
          %222 = vst.msk [vmem:[%s161] sm:$0x3] %vm215, %v221
        $region36: #{tpu_custom_call.1} parent=23 // pred_fallthru
          _
        %s223 = sand.u32 %s77, 1
        %s224 = scalar_lea.sflag [#allocation4], %s223
        %s225 = sand.u32 %s77, 1
        %s226 = smul.addr %s225, 2
        %s227 = scalar_lea.vmem [#allocation5], %s226
        // Predicated region
        $region37: #{tpu_custom_call.1} parent=23 // pred_check
          %p228 = pneg %p87
        $region38: #{tpu_custom_call.1} parent=23 // pred_check_branch
          %230 = sbr.rel (%p228) target = $region40
        $region39: #{tpu_custom_call.1} parent=23 // pred_region
          %s231 = smul.u32 2, %s24
          %s233 = ssub.s32 32, 32
          %234 = vsyncadd %s224, %s233
          %s235 = smul.addr %s23, 2
          %s236 = sadd.s32 %s231, %s235
          %s237 = smul.addr %s236, 16
          %s238 = scalar_lea.hbm %s1, %s237
          %s240 = sshll.u32 %s227, 4
          %s241 = int_to_ptr.vmem [resolvable:$true] %s240
          %243 = dma.vmem_to_hbm [thread:$0]  %s241, 32, %s238, %s224
        $region40: #{tpu_custom_call.1} parent=23 // pred_fallthru
          _
      $region24: #{tpu_custom_call.1} parent=5 // pred_fallthru
        _
      %p244 = scmp.le.s32.totalorder 2, %s13
      // Predicated region
      $region41: #{tpu_custom_call.1} parent=5 // pred_check
        %p245 = pneg %p244
      $region42: #{tpu_custom_call.1} parent=5 // pred_check_branch
        %247 = sbr.rel (%p245) target = $region44
      $region43: #{tpu_custom_call.1} parent=5 // pred_region
        %s248 = ssub.s32 %s13, 2
        // Predicated region
        $region45: #{tpu_custom_call.1} parent=43 // pred_check
          %p249 = pneg %p93
        $region46: #{tpu_custom_call.1} parent=43 // pred_check_branch
          %251 = sbr.rel (%p249) target = $region48
        $region47: #{tpu_custom_call.1} parent=43 // pred_region
          %s252 = sand.u32 %s78, 1
          %s253 = scalar_lea.sflag [#allocation4], %s252
          %s254 = sand.u32 %s78, 1
          %s255 = smul.addr %s254, 2
          %s256 = scalar_lea.vmem [#allocation5], %s255
          %257 = dma.done %s253, 32
        $region48: #{tpu_custom_call.1} parent=43 // pred_fallthru
          _
      $region44: #{tpu_custom_call.1} parent=5 // pred_fallthru
        _
    $region6: #{tpu_custom_call.1} parent=1 // loop_footer
      %s17 = sadd.s32 1, %s13
    $region7: #{tpu_custom_call.1} parent=1 // loop_footer_branch
      %12 = sbr.rel target = $region3
    $region8: #{tpu_custom_call.1} parent=1 // loop_exit
      _
    %258 = vsyncpa [#allocation3], 1
    %s259 = scalar_lea.sflag [#allocation3], 1
    %260 = vsyncpa %s259, 1
    %261 = vsyncpa [#allocation4], 1
    %s262 = scalar_lea.sflag [#allocation4], 1
    %263 = vsyncpa %s262, 1

</llo_original>
